<compile_context>
chip_gen: v7x
topology: tpu7x:2x2x1
jax: 0.10.0
libtpu: 0.0.40
codegen_flags: <defaults>
</compile_context>

<pallas_src>
import functools

import jax
import jax.numpy as jnp
from jax.experimental import pallas as pl
from jax.experimental.pallas import tpu as pltpu


def _relber_leaky_kernel(x_ref, mem_ref, mask_ref, u_ref,
                         spk_ref, mem_out_ref, spiked_ref,
                         *, beta, threshold, inv_temp, use_relaxed):
    """Elementwise hot path: leak-integrate, per-row reset, stochastic fire."""
    x = x_ref[...].astype(jnp.float32)
    mem = beta * mem_ref[...].astype(jnp.float32) + x
    # mem[is_spiking_row] -= threshold  (mask is (B,1) of 0/1, broadcast over lanes)
    mem = mem - threshold * mask_ref[...].astype(jnp.float32)
    mem_out_ref[...] = mem.astype(mem_out_ref.dtype)

    logits = mem - threshold
    u = u_ref[...]                     # uniform(0,1) noise, f32

    if use_relaxed:
        # RelaxedBernoulli rsample: sigmoid((logits + logistic_noise) / temp)
        eps = jnp.float32(1e-7)
        uc = jnp.clip(u, eps, 1.0 - eps)
        noise = jnp.log(uc) - jnp.log(1.0 - uc)
        spk = jax.nn.sigmoid((logits + noise) * jnp.float32(inv_temp))
    else:
        # Bernoulli(logits).sample(): U < sigmoid(logits)
        p = jax.nn.sigmoid(logits)
        spk = (u < p).astype(jnp.float32)

    spk_ref[...] = spk.astype(spk_ref.dtype)

    # Fused per-row reduction: max over this tile's lanes, broadcast to a
    # lane-dense (B, 128) output block (one block per grid step).
    tile_max = jnp.max(spk, axis=-1, keepdims=True)            # (B, 1)
    spiked_ref[...] = jnp.broadcast_to(tile_max, spiked_ref.shape).astype(jnp.float32)


def _pick_tile_n(B):
    """Largest lane tile that keeps the double-buffered pipeline well inside VMEM
    (sized for v7x's smaller VMEM; v5e/v6e have more headroom)."""
    budget = 24 * 1024 * 1024
    # 5 tiled (B, TN) arrays (x, mem, u, spk, mem_new), double-buffered, ~f32,
    # sublanes padded to at least 8.
    per_lane = 5 * 2 * max(B, 8) * 4
    tn = budget // per_lane
    return int(max(128, min(2048, (tn // 128) * 128)))


def relber_leaky_forward(x, mem=None, is_spiking=None, *,
                         beta=0.9, threshold=1.0, temp=0.0,
                         key=None, tile_n=None):
    """Functional equivalent of RelBerLeaky.forward.

    Args:
      x:          (B, C, H, W) float input (NCHW, like the PyTorch module).
      mem:        optional (B, C, H, W) membrane potential; zeros if None.
      is_spiking: optional (B,) bool/float per-sample "spiked last step" flag.
      temp:       Python float; 0 -> hard Bernoulli sample, !=0 -> relaxed.
      key:        jax PRNG key for the firing noise.
      tile_n:     optional lane-tile override (multiple of 128).
    Returns:
      (spk, mem_new, is_spiking_new) with spk/mem_new shaped like x.
    """
    orig_shape = x.shape
    B = x.shape[0]
    xf = x.reshape(B, -1)
    if not jnp.issubdtype(xf.dtype, jnp.floating):
        xf = xf.astype(jnp.float32)
    dtype = xf.dtype
    itemsize = jnp.dtype(dtype).itemsize
    N = xf.shape[1]

    memf = (jnp.zeros_like(xf) if mem is None
            else mem.reshape(B, -1).astype(dtype))
    mask = (jnp.zeros((B, 1), jnp.float32) if is_spiking is None
            else is_spiking.reshape(B, 1).astype(jnp.float32))

    # --- choose an (8,128)-aligned lane tile and pad N up to a tile multiple ---
    TN = _pick_tile_n(B) if tile_n is None else int(tile_n)
    TN = max(128, min(2048, (TN // 128) * 128))
    n_tiles = int(pl.cdiv(N, TN))
    Np = n_tiles * TN
    pad = Np - N

    if key is None:
        key = jax.random.PRNGKey(0)
    u = jax.random.uniform(key, (B, N), dtype=jnp.float32)

    if pad:
        xf = jnp.pad(xf, ((0, 0), (0, pad)))
        memf = jnp.pad(memf, ((0, 0), (0, pad)))
        # u = 1.0 on padded lanes so they can never fire on the hard path.
        u = jnp.pad(u, ((0, 0), (0, pad)), constant_values=1.0)

    use_relaxed = (float(temp) != 0.0)
    inv_temp = (1.0 / float(temp)) if use_relaxed else 1.0

    kernel = functools.partial(
        _relber_leaky_kernel,
        beta=float(beta), threshold=float(threshold),
        inv_temp=inv_temp, use_relaxed=use_relaxed)

    bytes_accessed = (2 * B * Np * itemsize          # x, mem reads
                      + B * Np * 4                   # uniform noise read
                      + 2 * B * Np * itemsize        # spk, mem_new writes
                      + B * n_tiles * 128 * 4        # fused reduction output
                      + B * 4)                       # row mask
    cost = pl.CostEstimate(
        flops=6 * B * Np,
        transcendentals=B * Np * (3 if use_relaxed else 1),
        bytes_accessed=bytes_accessed)

    spk, mem_new, spiked = pl.pallas_call(
        kernel,
        grid=(n_tiles,),
        in_specs=[
            pl.BlockSpec((B, TN), lambda i: (0, i)),   # input_
            pl.BlockSpec((B, TN), lambda i: (0, i)),   # mem (aliased to mem_new)
            pl.BlockSpec((B, 1), lambda i: (0, 0)),    # per-row is_spiking mask (resident)
            pl.BlockSpec((B, TN), lambda i: (0, i)),   # uniform noise
        ],
        out_specs=(
            pl.BlockSpec((B, TN), lambda i: (0, i)),   # spk
            pl.BlockSpec((B, TN), lambda i: (0, i)),   # new mem
            pl.BlockSpec((B, 128), lambda i: (0, i)),  # per-tile row max of spk
        ),
        out_shape=(
            jax.ShapeDtypeStruct((B, Np), dtype),
            jax.ShapeDtypeStruct((B, Np), dtype),
            jax.ShapeDtypeStruct((B, n_tiles * 128), jnp.float32),
        ),
        input_output_aliases={1: 1},                   # mem updated in place
        compiler_params=pltpu.CompilerParams(
            dimension_semantics=("parallel",),
            vmem_limit_bytes=48 * 1024 * 1024),
        cost_estimate=cost,
    )(xf, memf, mask, u)

    spk = spk[:, :N].reshape(orig_shape)
    mem_new = mem_new[:, :N].reshape(orig_shape)
    # Tiny (B, n_tiles) reduction of the fused per-tile maxima.
    is_spiking_new = jnp.max(
        spiked.reshape(B, n_tiles, 128)[:, :, 0], axis=1) > 0
    return spk, mem_new, is_spiking_new


if __name__ == "__main__":
    key = jax.random.PRNGKey(0)
    kx, km, kn1, kn2 = jax.random.split(key, 4)

    B, C, H, W = 2, 4, 16, 16
    x = jax.random.normal(kx, (B, C, H, W), dtype=jnp.float32)
    mem0 = jax.random.normal(km, (B, C, H, W), dtype=jnp.float32)
    is_spiking0 = jnp.array([True, False])

    beta, threshold = 0.9, 1.0

    # Hard Bernoulli firing path (temp == 0); small tile to exercise the
    # multi-tile pipelined grid (N = 1024 -> 4 tiles of 256 lanes).
    spk, mem1, is_spk1 = relber_leaky_forward(
        x, mem0, is_spiking0, beta=beta, threshold=threshold, temp=0.0,
        key=kn1, tile_n=256)
    jax.block_until_ready((spk, mem1, is_spk1))

    # Relaxed (differentiable) firing path (temp != 0), default large tile
    # (exercises the lane-padding path as well).
    spk_r, mem_r, is_spk_r = relber_leaky_forward(
        x, mem0, is_spiking0, beta=beta, threshold=threshold, temp=0.5, key=kn2)
    jax.block_until_ready((spk_r, mem_r, is_spk_r))

    # Deterministic part of the update must match the reference exactly.
    mem_ref = beta * mem0 + x - threshold * is_spiking0.astype(jnp.float32)[:, None, None, None]
    assert jnp.allclose(mem1, mem_ref, atol=1e-6), "membrane update mismatch (hard path)"
    assert jnp.allclose(mem_r, mem_ref, atol=1e-6), "membrane update mismatch (relaxed path)"
    # Spikes are in the right domain.
    assert bool(jnp.all((spk == 0.0) | (spk == 1.0))), "hard spikes must be binary"
    assert bool(jnp.all((spk_r >= 0.0) & (spk_r <= 1.0))), "relaxed spikes in (0,1)"
    # Fused per-row reduction agrees with a host-side recompute.
    assert bool(jnp.all(is_spk1 == jnp.any(spk.reshape(B, -1) > 0, axis=-1))), \
        "fused is_spiking reduction mismatch"

    print("KERNEL_OK")
</pallas_src>

<mosaic_0001>
module attributes {stable_mosaic.version = 11 : i64} {
  func.func @_relber_leaky_kernel(%arg0: i32, %arg1: memref<2x256xf32, #tpu.memory_space<vmem>>, %arg2: memref<2x256xf32, #tpu.memory_space<vmem>>, %arg3: memref<2x1xf32, #tpu.memory_space<vmem>>, %arg4: memref<2x256xf32, #tpu.memory_space<vmem>>, %arg5: memref<2x256xf32, #tpu.memory_space<vmem>>, %arg6: memref<2x256xf32, #tpu.memory_space<vmem>>, %arg7: memref<2x128xf32, #tpu.memory_space<vmem>>) attributes {dimension_semantics = [#tpu.dimension_semantics<parallel>], iteration_bounds = array<i64: 4>, scalar_prefetch = 0 : i64, scratch_operands = 0 : i64, tpu.core_type = #tpu.core_type<tc>, window_params = [{transform_indices = @transform_0, window_bounds = array<i64: 2, 256>}, {transform_indices = @transform_1, window_bounds = array<i64: 2, 256>}, {pipeline_mode = #tpu.pipeline_mode<synchronous>, transform_indices = @transform_2, window_bounds = array<i64: 2, 1>}, {transform_indices = @transform_3, window_bounds = array<i64: 2, 256>}, {transform_indices = @transform_4, window_bounds = array<i64: 2, 256>}, {transform_indices = @transform_5, window_bounds = array<i64: 2, 256>}, {transform_indices = @transform_6, window_bounds = array<i64: 2, 128>}]} {
    %c0 = arith.constant 0 : index
    %c0_0 = arith.constant 0 : index
    %0 = vector.load %arg1[%c0, %c0_0] : memref<2x256xf32, #tpu.memory_space<vmem>>, vector<2x256xf32>
    %c0_1 = arith.constant 0 : index
    %c0_2 = arith.constant 0 : index
    %1 = vector.load %arg2[%c0_1, %c0_2] : memref<2x256xf32, #tpu.memory_space<vmem>>, vector<2x256xf32>
    %cst = arith.constant 0.899999976 : f32
    %2 = vector.broadcast %cst : f32 to vector<2x256xf32>
    %3 = arith.mulf %2, %1 : vector<2x256xf32>
    %4 = arith.addf %3, %0 : vector<2x256xf32>
    %c0_3 = arith.constant 0 : index
    %c0_4 = arith.constant 0 : index
    %5 = vector.load %arg3[%c0_3, %c0_4] : memref<2x1xf32, #tpu.memory_space<vmem>>, vector<2x1xf32>
    %cst_5 = arith.constant 1.000000e+00 : f32
    %6 = vector.broadcast %cst_5 : f32 to vector<2x1xf32>
    %7 = arith.mulf %6, %5 : vector<2x1xf32>
    %8 = vector.broadcast %7 : vector<2x1xf32> to vector<2x256xf32>
    %9 = arith.subf %4, %8 : vector<2x256xf32>
    %c0_6 = arith.constant 0 : index
    %c0_7 = arith.constant 0 : index
    %10 = vector.load %arg6[%c0_6, %c0_7] : memref<2x256xf32, #tpu.memory_space<vmem>>, vector<2x256xf32>
    tpu.vector_store %arg6[%c0_6, %c0_7], %9 {strides = array<i32>} : memref<2x256xf32, #tpu.memory_space<vmem>>, vector<2x256xf32>,
    %cst_8 = arith.constant 1.000000e+00 : f32
    %11 = vector.broadcast %cst_8 : f32 to vector<2x256xf32>
    %12 = arith.subf %9, %11 : vector<2x256xf32>
    %c0_9 = arith.constant 0 : index
    %c0_10 = arith.constant 0 : index
    %13 = vector.load %arg4[%c0_9, %c0_10] : memref<2x256xf32, #tpu.memory_space<vmem>>, vector<2x256xf32>
    %14 = arith.negf %12 : vector<2x256xf32>
    %15 = math.exp %14 : vector<2x256xf32>
    %cst_11 = arith.constant 1.000000e+00 : f32
    %16 = vector.broadcast %cst_11 : f32 to vector<2x256xf32>
    %17 = arith.addf %16, %15 : vector<2x256xf32>
    %18 = arith.divf %16, %17 : vector<2x256xf32>
    %19 = arith.cmpf olt, %13, %18 : vector<2x256xf32>
    %20 = arith.extui %19 : vector<2x256xi1> to vector<2x256xi32>
    %21 = arith.sitofp %20 : vector<2x256xi32> to vector<2x256xf32>
    %c0_12 = arith.constant 0 : index
    %c0_13 = arith.constant 0 : index
    %22 = vector.load %arg5[%c0_12, %c0_13] : memref<2x256xf32, #tpu.memory_space<vmem>>, vector<2x256xf32>
    tpu.vector_store %arg5[%c0_12, %c0_13], %21 {strides = array<i32>} : memref<2x256xf32, #tpu.memory_space<vmem>>, vector<2x256xf32>,
    %cst_14 = arith.constant dense<0xFF800000> : vector<2xf32>
    %23 = vector.multi_reduction <maximumf>, %21, %cst_14 [1] : vector<2x256xf32> to vector<2xf32>
    %24 = vector.shape_cast %23 : vector<2xf32> to vector<2x1xf32>
    %25 = vector.shape_cast %24 : vector<2x1xf32> to vector<2x1xf32>
    %26 = vector.broadcast %25 : vector<2x1xf32> to vector<2x128xf32>
    %c0_15 = arith.constant 0 : index
    %c0_16 = arith.constant 0 : index
    %27 = vector.load %arg7[%c0_15, %c0_16] : memref<2x128xf32, #tpu.memory_space<vmem>>, vector<2x128xf32>
    tpu.vector_store %arg7[%c0_15, %c0_16], %26 {strides = array<i32>} : memref<2x128xf32, #tpu.memory_space<vmem>>, vector<2x128xf32>,
    return
  }
  func.func @transform_0(%arg0: i32) -> (i32, i32) {
    %c0_i32 = arith.constant 0 : i32
    %c0_i32_0 = arith.constant 0 : i32
    return %c0_i32, %arg0 : i32, i32
  }
  func.func @transform_1(%arg0: i32) -> (i32, i32) {
    %c0_i32 = arith.constant 0 : i32
    %c0_i32_0 = arith.constant 0 : i32
    return %c0_i32, %arg0 : i32, i32
  }
  func.func @transform_2(%arg0: i32) -> (i32, i32) {
    %c0_i32 = arith.constant 0 : i32
    %c0_i32_0 = arith.constant 0 : i32
    %c0_i32_1 = arith.constant 0 : i32
    return %c0_i32, %c0_i32_0 : i32, i32
  }
  func.func @transform_3(%arg0: i32) -> (i32, i32) {
    %c0_i32 = arith.constant 0 : i32
    %c0_i32_0 = arith.constant 0 : i32
    return %c0_i32, %arg0 : i32, i32
  }
  func.func @transform_4(%arg0: i32) -> (i32, i32) {
    %c0_i32 = arith.constant 0 : i32
    %c0_i32_0 = arith.constant 0 : i32
    return %c0_i32, %arg0 : i32, i32
  }
  func.func @transform_5(%arg0: i32) -> (i32, i32) {
    %c0_i32 = arith.constant 0 : i32
    %c0_i32_0 = arith.constant 0 : i32
    return %c0_i32, %arg0 : i32, i32
  }
  func.func @transform_6(%arg0: i32) -> (i32, i32) {
    %c0_i32 = arith.constant 0 : i32
    %c0_i32_0 = arith.constant 0 : i32
    return %c0_i32, %arg0 : i32, i32
  }
}

</mosaic_0001>

<llo_original>
// kernel: tpu_custom_call.1
$region0: #{tpu_custom_call.1}
  #allocation0 [shape = 'u32[]', space=smem, size = 0x4, offset = 0x4, fixed_abs, tag = 'smem constant byte address 0x4 - core index']
  #allocation1 [shape = 'u32[144,128]{1,0:T(1,128)}', space=vmem, size = 0x12000, scoped, tag = 'internal scratch']
  %s0 = inlined_call_operand.vmem [shape: f32[2,1024], index: 0, kind: input, shape index: {}]
  %s1 = inlined_call_operand.hbm [shape: f32[2,1024], index: 1, kind: input, shape index: {}, may-alias: {1,5}]
  %s2 = inlined_call_operand.vmem [shape: f32[2,1], index: 2, kind: input, shape index: {}]
  %s3 = inlined_call_operand.vmem [shape: f32[2,1024], index: 3, kind: input, shape index: {}]
  %s4 = inlined_call_operand.hbm [shape: f32[2,1024], index: 4, kind: output, shape index: {0}]
  %s5 = inlined_call_operand.hbm [shape: f32[2,1024], index: 5, kind: output, shape index: {1}, may-alias: {1,5}]
  %s6 = inlined_call_operand.hbm [shape: f32[2,512], index: 6, kind: output, shape index: {2}]
  %7 = xla_tuple %s4, %s5, %s6
  %s8 = sld [smem:[#allocation0]]
  $region69: #{tpu_custom_call.1} parent=0
    _
  %s10 = ssub.s32 1, %s8
  %s11 = scalar_select 0, %s10, %s8
  $region1: #{tpu_custom_call.1} parent=0
    #allocation2 [shape = 'u8[4096]{0}', space=vmem, size = 0x1000, scoped, tag = 'input window, operand 1']
    #allocation3 [shape = 's32[2]{0}', space=sflag, size = 0x8, scoped, tag = 'scoped memory for tpu_custom_call.1']
    #allocation4 [shape = 's32[2]{0}', space=sflag, size = 0x8, scoped, tag = 'scoped memory for tpu_custom_call.1']
    #allocation5 [shape = 'u8[4096]{0}', space=vmem, size = 0x1000, scoped, tag = 'output window, operand 0']
    #allocation6 [shape = 'u8[4096]{0}', space=vmem, size = 0x1000, scoped, tag = 'output window, operand 1']
    #allocation7 [shape = 's32[2]{0}', space=sflag, size = 0x8, scoped, tag = 'scoped memory for tpu_custom_call.1']
    #allocation8 [shape = 'u8[2048]{0}', space=vmem, size = 0x800, scoped, tag = 'output window, operand 2']
    %12 = vsyncpa [#allocation3], 0
    %s13 = scalar_lea.sflag [#allocation3], 1
    %14 = vsyncpa %s13, 0
    %15 = vsyncpa [#allocation4], 0
    %s16 = scalar_lea.sflag [#allocation4], 1
    %17 = vsyncpa %s16, 0
    %18 = vsyncpa [#allocation7], 0
    %s19 = scalar_lea.sflag [#allocation7], 1
    %20 = vsyncpa %s19, 0
    loop: start=0, step=1, limit=6
    $region2: #{tpu_custom_call.1} parent=1 // loop_pre_header
      _
    $region3: #{tpu_custom_call.1} parent=1 // loop_header
      %s22 = sphi 0, %s26
      %p23 = scmp.ge.s32.totalorder %s22, 6
      %s32 = sphi 0, %s34
      %s35 = sphi 0, %s32
      %s36 = sphi 0, %s35
      %s52 = sphi 0, %s36
      %s58 = sphi 0, %s60
      %s61 = sphi 0, %s58
      %s62 = sphi 0, %s61
      %s78 = sphi 0, %s62
      %s82 = sphi 0, %s82
      %s84 = sphi 0, %s82
      %s85 = sphi 0, %s84
      %s99 = sphi 0, %s85
      %s105 = sphi 0, %s107
      %s108 = sphi 0, %s105
      %s109 = sphi 0, %s108
      %s125 = sphi 0, %s109
      %s131 = sphi 0, %s133
      %s134 = sphi 0, %s131
      %s135 = sphi 0, %s134
      %s151 = sphi 0, %s135
      %s157 = sphi 0, %s159
      %s160 = sphi 0, %s157
      %s161 = sphi 0, %s160
      %s177 = sphi 0, %s161
      %s183 = sphi 0, %s185
      %s186 = sphi 0, %s183
      %s187 = sphi 0, %s186
      %s203 = sphi 0, %s187
    $region4: #{tpu_custom_call.1} parent=1 // loop_header_branch
      %25 = sbr.rel (%p23) target = $region8
    $region5: #{tpu_custom_call.1} parent=1 // loop_body
      %s27 = ssub.s32 %s22, 1
      %s28 = ssub.s32 %s22, 2
      %s29 = sadd.s32 %s22, 1
      %s30 = ssub.s32 %s22, %s29
      %p31 = scmp.eq.s32.totalorder %s30, 0
      %s33 = sadd.s32 %s32, 1
      %s34 = scalar_select %p31, %s32, %s33
      %p37 = pneg %p31
      %p38 = scmp.eq.s32.totalorder %s22, 3
      %p39 = por %p37, %p38
      %p40 = scmp.ne.s32.totalorder %s32, %s35
      %p41 = scmp.eq.s32.totalorder %s22, 0
      %p42 = por %p40, %p41
      %p43 = scmp.ne.s32.totalorder %s32, %s35
      %p44 = scmp.eq.s32.totalorder %s27, 3
      %p45 = por %p43, %p44
      %p46 = scmp.ne.s32.totalorder %s35, %s36
      %p47 = scmp.eq.s32.totalorder %s27, 0
      %p48 = por %p46, %p47
      %p49 = scmp.ne.s32.totalorder %s35, %s36
      %p50 = scmp.eq.s32.totalorder %s28, 3
      %p51 = por %p49, %p50
      %p53 = scmp.ne.s32.totalorder %s36, %s52
      %p54 = scmp.eq.s32.totalorder %s28, 0
      %p55 = por %p53, %p54
      %s56 = ssub.s32 %s22, %s29
      %p57 = scmp.eq.s32.totalorder %s56, 0
      %s59 = sadd.s32 %s58, 1
      %s60 = scalar_select %p57, %s58, %s59
      %p63 = pneg %p57
      %p64 = scmp.eq.s32.totalorder %s22, 3
      %p65 = por %p63, %p64
      %p66 = scmp.ne.s32.totalorder %s58, %s61
      %p67 = scmp.eq.s32.totalorder %s22, 0
      %p68 = por %p66, %p67
      %p69 = scmp.ne.s32.totalorder %s58, %s61
      %p70 = scmp.eq.s32.totalorder %s27, 3
      %p71 = por %p69, %p70
      %p72 = scmp.ne.s32.totalorder %s61, %s62
      %p73 = scmp.eq.s32.totalorder %s27, 0
      %p74 = por %p72, %p73
      %p75 = scmp.ne.s32.totalorder %s61, %s62
      %p76 = scmp.eq.s32.totalorder %s28, 3
      %p77 = por %p75, %p76
      %p79 = scmp.ne.s32.totalorder %s62, %s78
      %p80 = scmp.eq.s32.totalorder %s28, 0
      %p81 = por %p79, %p80
      %s83 = sadd.s32 %s82, 1
      %p86 = scmp.eq.s32.totalorder %s22, 3
      %p87 = scmp.ne.s32.totalorder %s82, %s84
      %p88 = scmp.eq.s32.totalorder %s22, 0
      %p89 = por %p87, %p88
      %p90 = scmp.ne.s32.totalorder %s82, %s84
      %p91 = scmp.eq.s32.totalorder %s27, 3
      %p92 = por %p90, %p91
      %p93 = scmp.ne.s32.totalorder %s84, %s85
      %p94 = scmp.eq.s32.totalorder %s27, 0
      %p95 = por %p93, %p94
      %p96 = scmp.ne.s32.totalorder %s84, %s85
      %p97 = scmp.eq.s32.totalorder %s28, 3
      %p98 = por %p96, %p97
      %p100 = scmp.ne.s32.totalorder %s85, %s99
      %p101 = scmp.eq.s32.totalorder %s28, 0
      %p102 = por %p100, %p101
      %s103 = ssub.s32 %s22, %s29
      %p104 = scmp.eq.s32.totalorder %s103, 0
      %s106 = sadd.s32 %s105, 1
      %s107 = scalar_select %p104, %s105, %s106
      %p110 = pneg %p104
      %p111 = scmp.eq.s32.totalorder %s22, 3
      %p112 = por %p110, %p111
      %p113 = scmp.ne.s32.totalorder %s105, %s108
      %p114 = scmp.eq.s32.totalorder %s22, 0
      %p115 = por %p113, %p114
      %p116 = scmp.ne.s32.totalorder %s105, %s108
      %p117 = scmp.eq.s32.totalorder %s27, 3
      %p118 = por %p116, %p117
      %p119 = scmp.ne.s32.totalorder %s108, %s109
      %p120 = scmp.eq.s32.totalorder %s27, 0
      %p121 = por %p119, %p120
      %p122 = scmp.ne.s32.totalorder %s108, %s109
      %p123 = scmp.eq.s32.totalorder %s28, 3
      %p124 = por %p122, %p123
      %p126 = scmp.ne.s32.totalorder %s109, %s125
      %p127 = scmp.eq.s32.totalorder %s28, 0
      %p128 = por %p126, %p127
      %s129 = ssub.s32 %s22, %s29
      %p130 = scmp.eq.s32.totalorder %s129, 0
      %s132 = sadd.s32 %s131, 1
      %s133 = scalar_select %p130, %s131, %s132
      %p136 = pneg %p130
      %p137 = scmp.eq.s32.totalorder %s22, 3
      %p138 = por %p136, %p137
      %p139 = scmp.ne.s32.totalorder %s131, %s134
      %p140 = scmp.eq.s32.totalorder %s22, 0
      %p141 = por %p139, %p140
      %p142 = scmp.ne.s32.totalorder %s131, %s134
      %p143 = scmp.eq.s32.totalorder %s27, 3
      %p144 = por %p142, %p143
      %p145 = scmp.ne.s32.totalorder %s134, %s135
      %p146 = scmp.eq.s32.totalorder %s27, 0
      %p147 = por %p145, %p146
      %p148 = scmp.ne.s32.totalorder %s134, %s135
      %p149 = scmp.eq.s32.totalorder %s28, 3
      %p150 = por %p148, %p149
      %p152 = scmp.ne.s32.totalorder %s135, %s151
      %p153 = scmp.eq.s32.totalorder %s28, 0
      %p154 = por %p152, %p153
      %s155 = ssub.s32 %s22, %s29
      %p156 = scmp.eq.s32.totalorder %s155, 0
      %s158 = sadd.s32 %s157, 1
      %s159 = scalar_select %p156, %s157, %s158
      %p162 = pneg %p156
      %p163 = scmp.eq.s32.totalorder %s22, 3
      %p164 = por %p162, %p163
      %p165 = scmp.ne.s32.totalorder %s157, %s160
      %p166 = scmp.eq.s32.totalorder %s22, 0
      %p167 = por %p165, %p166
      %p168 = scmp.ne.s32.totalorder %s157, %s160
      %p169 = scmp.eq.s32.totalorder %s27, 3
      %p170 = por %p168, %p169
      %p171 = scmp.ne.s32.totalorder %s160, %s161
      %p172 = scmp.eq.s32.totalorder %s27, 0
      %p173 = por %p171, %p172
      %p174 = scmp.ne.s32.totalorder %s160, %s161
      %p175 = scmp.eq.s32.totalorder %s28, 3
      %p176 = por %p174, %p175
      %p178 = scmp.ne.s32.totalorder %s161, %s177
      %p179 = scmp.eq.s32.totalorder %s28, 0
      %p180 = por %p178, %p179
      %s181 = ssub.s32 %s22, %s29
      %p182 = scmp.eq.s32.totalorder %s181, 0
      %s184 = sadd.s32 %s183, 1
      %s185 = scalar_select %p182, %s183, %s184
      %p188 = pneg %p182
      %p189 = scmp.eq.s32.totalorder %s22, 3
      %p190 = por %p188, %p189
      %p191 = scmp.ne.s32.totalorder %s183, %s186
      %p192 = scmp.eq.s32.totalorder %s22, 0
      %p193 = por %p191, %p192
      %p194 = scmp.ne.s32.totalorder %s183, %s186
      %p195 = scmp.eq.s32.totalorder %s27, 3
      %p196 = por %p194, %p195
      %p197 = scmp.ne.s32.totalorder %s186, %s187
      %p198 = scmp.eq.s32.totalorder %s27, 0
      %p199 = por %p197, %p198
      %p200 = scmp.ne.s32.totalorder %s186, %s187
      %p201 = scmp.eq.s32.totalorder %s28, 3
      %p202 = por %p200, %p201
      %p204 = scmp.ne.s32.totalorder %s187, %s203
      %p205 = scmp.eq.s32.totalorder %s28, 0
      %p206 = por %p204, %p205
      %p207 = scmp.le.s32.totalorder 1, %s22
      %p208 = scmp.lt.s32.totalorder %s22, 5
      %p209 = pnand %p207, %p208
      %p210 = pneg %p209
      // Predicated region
      $region9: #{tpu_custom_call.1} parent=5 // pred_check
        _
      $region10: #{tpu_custom_call.1} parent=5 // pred_check_branch
        %212 = sbr.rel (%p209) target = $region12
      $region11: #{tpu_custom_call.1} parent=5 // pred_region
        %s213 = ssub.s32 %s22, 1
        // Predicated region
        $region13: #{tpu_custom_call.1} parent=11 // pred_check
          %p214 = pneg %p95
        $region14: #{tpu_custom_call.1} parent=11 // pred_check_branch
          %216 = sbr.rel (%p214) target = $region16
        $region15: #{tpu_custom_call.1} parent=11 // pred_region
          _
        $region16: #{tpu_custom_call.1} parent=11 // pred_fallthru
          _
      $region12: #{tpu_custom_call.1} parent=5 // pred_fallthru
        _
      %p217 = scmp.lt.s32.totalorder %s22, 4
      // Predicated region
      $region17: #{tpu_custom_call.1} parent=5 // pred_check
        %p218 = pneg %p217
      $region18: #{tpu_custom_call.1} parent=5 // pred_check_branch
        %220 = sbr.rel (%p218) target = $region20
      $region19: #{tpu_custom_call.1} parent=5 // pred_region
        // Predicated region
        $region21: #{tpu_custom_call.1} parent=19 // pred_check
          %p221 = pneg %p42
        $region22: #{tpu_custom_call.1} parent=19 // pred_check_branch
          %223 = sbr.rel (%p221) target = $region24
        $region23: #{tpu_custom_call.1} parent=19 // pred_region
          %s224 = smul.u32 2, %s22
          %p225 = scmp.lt.s32.totalorder %s224, 7
          %s226 = scalar_select %p225, %s224, 7
          %s227 = smul.addr %s226, 2
          %s228 = scalar_lea.vmem %s0, %s227
          %s229 = smul.u32 2, %s22
        $region24: #{tpu_custom_call.1} parent=19 // pred_fallthru
          _
        // Predicated region
        $region25: #{tpu_custom_call.1} parent=19 // pred_check
          %p230 = pneg %p68
        $region26: #{tpu_custom_call.1} parent=19 // pred_check_branch
          %232 = sbr.rel (%p230) target = $region28
        $region27: #{tpu_custom_call.1} parent=19 // pred_region
          %s233 = sand.u32 %s58, 1
          %s234 = scalar_lea.sflag [#allocation3], %s233
          %s235 = sand.u32 %s58, 1
          %s236 = smul.addr %s235, 4
          %s237 = scalar_lea.vmem [#allocation2], %s236
          %s238 = smul.u32 2, %s22
          %s240 = ssub.s32 64, 64
          %241 = vsyncadd %s234, %s240
          %s242 = smul.addr %s238, 32
          %s243 = scalar_lea.hbm %s1, %s242
          %s245 = sshll.u32 %s237, 4
          %s246 = int_to_ptr.vmem [resolvable:$true] %s245
          %248 = dma.hbm_to_vmem [thread:$0]  %s243, 64, %s246, %s234
        $region28: #{tpu_custom_call.1} parent=19 // pred_fallthru
          _
        // Predicated region
        $region29: #{tpu_custom_call.1} parent=19 // pred_check
          %p249 = pneg %p115
        $region30: #{tpu_custom_call.1} parent=19 // pred_check_branch
          %251 = sbr.rel (%p249) target = $region32
        $region31: #{tpu_custom_call.1} parent=19 // pred_region
          %s252 = smul.u32 2, %s22
          %p253 = scmp.lt.s32.totalorder %s252, 7
          %s254 = scalar_select %p253, %s252, 7
          %s255 = smul.addr %s254, 2
          %s256 = scalar_lea.vmem %s3, %s255
          %s257 = smul.u32 2, %s22
        $region32: #{tpu_custom_call.1} parent=19 // pred_fallthru
          _
      $region20: #{tpu_custom_call.1} parent=5 // pred_fallthru
        _
      %p258 = scmp.le.s32.totalorder 1, %s22
      %p259 = scmp.lt.s32.totalorder %s22, 5
      %p260 = pnand %p258, %p259
      %p261 = pneg %p260
      // Predicated region
      $region33: #{tpu_custom_call.1} parent=5 // pred_check
        _
      $region34: #{tpu_custom_call.1} parent=5 // pred_check_branch
        %263 = sbr.rel (%p260) target = $region36
      $region35: #{tpu_custom_call.1} parent=5 // pred_region
        %s264 = ssub.s32 %s22, 1
        %s265 = sand.u32 %s61, 1
        %s266 = scalar_lea.sflag [#allocation3], %s265
        %s267 = sand.u32 %s61, 1
        %s268 = smul.addr %s267, 4
        %s269 = scalar_lea.vmem [#allocation2], %s268
        // Predicated region
        $region37: #{tpu_custom_call.1} parent=35 // pred_check
          %p270 = pneg %p74
        $region38: #{tpu_custom_call.1} parent=35 // pred_check_branch
          %272 = sbr.rel (%p270) target = $region40
        $region39: #{tpu_custom_call.1} parent=35 // pred_region
          %273 = dma.done %s266, 64
        $region40: #{tpu_custom_call.1} parent=35 // pred_fallthru
          _
        %s274 = smul.u32 2, %s27
        %p275 = scmp.lt.s32.totalorder %s274, 7
        %s276 = scalar_select %p275, %s274, 7
        %s277 = smul.addr %s276, 2
        %s278 = scalar_lea.vmem %s0, %s277
        %p279 = pneg %p48
        %p280 = pneg %p45
        %s281 = sand.u32 %s61, 1
        %s282 = scalar_lea.sflag [#allocation3], %s281
        %s283 = sand.u32 %s61, 1
        %s284 = smul.addr %s283, 4
        %s285 = scalar_lea.vmem [#allocation2], %s284
        %p286 = pneg %p74
        %p287 = pneg %p71
        %p288 = pneg %p95
        %p289 = pneg %p92
        %s290 = smul.u32 2, %s27
        %p291 = scmp.lt.s32.totalorder %s290, 7
        %s292 = scalar_select %p291, %s290, 7
        %s293 = smul.addr %s292, 2
        %s294 = scalar_lea.vmem %s3, %s293
        %p295 = pneg %p121
        %p296 = pneg %p118
        %p297 = pneg %p147
        %p298 = pneg %p144
        %s299 = sand.u32 %s134, 1
        %s300 = scalar_lea.sflag [#allocation4], %s299
        %s301 = sand.u32 %s134, 1
        %s302 = smul.addr %s301, 4
        %s303 = scalar_lea.vmem [#allocation5], %s302
        %p304 = pneg %p173
        %p305 = pneg %p170
        %s306 = sand.u32 %s27, 1
        %s307 = scalar_lea.sflag [#allocation7], %s306
        %s308 = sand.u32 %s160, 1
        %s309 = smul.addr %s308, 4
        %s310 = scalar_lea.vmem [#allocation6], %s309
        %p311 = pneg %p199
        %p312 = pneg %p196
        %s313 = sand.u32 %s27, 1
        %s314 = scalar_lea.sflag [#allocation7], %s313
        %s315 = sand.u32 %s186, 1
        %s316 = smul.addr %s315, 2
        %s317 = scalar_lea.vmem [#allocation8], %s316
        %s318 = smul.u32 2, %s27
        %p319 = scmp.lt.s32.totalorder %s318, 7
        %s320 = scalar_select %p319, %s318, 7
        %s321 = smul.addr %s320, 2
        %s322 = scalar_lea.vmem %s0, %s321
        %s323 = smul.u32 2, %s27
        %s324 = smul.u32 2, %s27
        %s325 = smul.u32 2, %s27
        %p326 = scmp.lt.s32.totalorder %s325, 7
        %s327 = scalar_select %p326, %s325, 7
        %s328 = smul.addr %s327, 2
        %s329 = scalar_lea.vmem %s3, %s328
        %s330 = smul.u32 2, %s27
        %s331 = smul.u32 2, %s27
        %s332 = smul.u32 2, %s27
        %v333 = vld [vmem:[%s322] sm:$0xf]
        %v334 = vld [vmem:[%s269] sm:$0xf]
        %v335 = vmul.f32 %v334, 0.9
        %v336 = vadd.f32 %v335, %v333
        %v337 = vld [vmem:[%s2] sm:$0x3]
        %339 = vset.pattern.permute.xlu0 0
        %340 = vperm.xlu0 %339, %v337
        %v341 = vpop.permute.xlu0 %340
        %v343 = vunpack.c.l.s4 269488144
        %v344 = vunpack.c.0.s8 %v343
        %v345 = vlaneseq
        %v346 = vshrl.u32 %v345, 7
        %v347 = vsub.s32 %v344, %v346
        %v348 = vrot.slane %v341, %v347
        %v350 = vsub.f32 %v336, %v348
        %351 = vst [vmem:[%s310] sm:$0xf] %v350
        %v352 = vsub.f32 %v350, 1.0
        %v353 = vld [vmem:[%s329] sm:$0xf]
        %v354 = vxor.u32 %v352, 2147483648
        %v355 = vmul.f32 %v354, 1.442695
        %v356 = vpow.pop %v355
        %v357 = vadd.f32 %v356, 1.0
        %v358 = vrcp.pop %v357
        %v359 = vmul.f32 1.0, %v358
        %vm360 = vcmp.lt.f32.partialorder %v353, %v359
        %v361 = vsel %vm360, 1, 0
        %v362 = vcvt.s32.f32 %v361
        %363 = vst [vmem:[%s303] sm:$0xf] %v362
        %v366 = vunpack.c.l.s4 1983009808
        %v367 = vunpack.c.0.s8 %v366
        %v368 = vlaneseq
        %v369 = vshrl.u32 %v368, 7
        %v370 = vsub.s32 %v367, %v369
        %v371 = vrot.slane %v362, %v370
        %v372 = vcombine.high %v371, %v371
        %vm375 = vcmask 1041408
        %v376 = vsel %vm375, %v371, -inf
        %v377 = vsel %vm375, %v372, -inf
        %v378 = vmax.f32 %v376, %v377
        %379 = vmax.xlane.f32.xlu0 %v378
        %v380 = vpop.xlane.xlu0 %379
        %381 = vst [vmem:[%s317] sm:$0x3] %v380
        %s382 = sand.u32 %s134, 1
        %s383 = scalar_lea.sflag [#allocation4], %s382
        %s384 = sand.u32 %s134, 1
        %s385 = smul.addr %s384, 4
        %s386 = scalar_lea.vmem [#allocation5], %s385
        %s387 = sand.u32 %s27, 1
        %s388 = scalar_lea.sflag [#allocation7], %s387
        %s389 = sand.u32 %s160, 1
        %s390 = smul.addr %s389, 4
        %s391 = scalar_lea.vmem [#allocation6], %s390
        %s392 = sand.u32 %s27, 1
        %s393 = scalar_lea.sflag [#allocation7], %s392
        %s394 = sand.u32 %s186, 1
        %s395 = smul.addr %s394, 2
        %s396 = scalar_lea.vmem [#allocation8], %s395
        // Predicated region
        $region41: #{tpu_custom_call.1} parent=35 // pred_check
          %p397 = pneg %p144
        $region42: #{tpu_custom_call.1} parent=35 // pred_check_branch
          %399 = sbr.rel (%p397) target = $region44
        $region43: #{tpu_custom_call.1} parent=35 // pred_region
          %s400 = smul.u32 2, %s27
          %s402 = ssub.s32 64, 64
          %403 = vsyncadd %s383, %s402
          %s404 = smul.addr %s400, 32
          %s405 = scalar_lea.hbm %s4, %s404
          %s407 = sshll.u32 %s386, 4
          %s408 = int_to_ptr.vmem [resolvable:$true] %s407
          %410 = dma.vmem_to_hbm [thread:$0]  %s408, 64, %s405, %s383
        $region44: #{tpu_custom_call.1} parent=35 // pred_fallthru
          _
        // Predicated region
        $region45: #{tpu_custom_call.1} parent=35 // pred_check
          %p411 = pneg %p170
        $region46: #{tpu_custom_call.1} parent=35 // pred_check_branch
          %413 = sbr.rel (%p411) target = $region48
        $region47: #{tpu_custom_call.1} parent=35 // pred_region
          %s414 = smul.u32 2, %s27
          %s416 = ssub.s32 64, 64
          %417 = vsyncadd %s388, %s416
          %s418 = smul.addr %s414, 32
          %s419 = scalar_lea.hbm %s5, %s418
          %s421 = sshll.u32 %s391, 4
          %s422 = int_to_ptr.vmem [resolvable:$true] %s421
          %424 = dma.vmem_to_hbm [thread:$0]  %s422, 64, %s419, %s388
        $region48: #{tpu_custom_call.1} parent=35 // pred_fallthru
          _
        // Predicated region
        $region49: #{tpu_custom_call.1} parent=35 // pred_check
          %p425 = pneg %p196
        $region50: #{tpu_custom_call.1} parent=35 // pred_check_branch
          %427 = sbr.rel (%p425) target = $region52
        $region51: #{tpu_custom_call.1} parent=35 // pred_region
          %s429 = ssub.s32 32, 32
          %430 = vsyncadd %s393, %s429
          %s431 = smul.addr %s27, 32
          %s432 = scalar_lea.hbm %s6, %s431
          %s434 = sshll.u32 %s396, 4
          %s435 = int_to_ptr.vmem [resolvable:$true] %s434
          %437 = dma.vmem_to_hbm [thread:$0]  %s435, 32, %s432, %s393
        $region52: #{tpu_custom_call.1} parent=35 // pred_fallthru
          _
      $region36: #{tpu_custom_call.1} parent=5 // pred_fallthru
        _
      %p438 = scmp.le.s32.totalorder 2, %s22
      // Predicated region
      $region53: #{tpu_custom_call.1} parent=5 // pred_check
        %p439 = pneg %p438
      $region54: #{tpu_custom_call.1} parent=5 // pred_check_branch
        %441 = sbr.rel (%p439) target = $region56
      $region55: #{tpu_custom_call.1} parent=5 // pred_region
        %s442 = ssub.s32 %s22, 2
        // Predicated region
        $region57: #{tpu_custom_call.1} parent=55 // pred_check
          %p443 = pneg %p150
        $region58: #{tpu_custom_call.1} parent=55 // pred_check_branch
          %445 = sbr.rel (%p443) target = $region60
        $region59: #{tpu_custom_call.1} parent=55 // pred_region
          %s446 = sand.u32 %s135, 1
          %s447 = scalar_lea.sflag [#allocation4], %s446
          %s448 = sand.u32 %s135, 1
          %s449 = smul.addr %s448, 4
          %s450 = scalar_lea.vmem [#allocation5], %s449
          %451 = dma.done %s447, 64
        $region60: #{tpu_custom_call.1} parent=55 // pred_fallthru
          _
        // Predicated region
        $region61: #{tpu_custom_call.1} parent=55 // pred_check
          %p452 = pneg %p176
        $region62: #{tpu_custom_call.1} parent=55 // pred_check_branch
          %454 = sbr.rel (%p452) target = $region64
        $region63: #{tpu_custom_call.1} parent=55 // pred_region
          %s455 = sand.u32 %s28, 1
          %s456 = scalar_lea.sflag [#allocation7], %s455
          %s457 = sand.u32 %s161, 1
          %s458 = smul.addr %s457, 4
          %s459 = scalar_lea.vmem [#allocation6], %s458
          %460 = dma.done %s456, 64
        $region64: #{tpu_custom_call.1} parent=55 // pred_fallthru
          _
        // Predicated region
        $region65: #{tpu_custom_call.1} parent=55 // pred_check
          %p461 = pneg %p202
        $region66: #{tpu_custom_call.1} parent=55 // pred_check_branch
          %463 = sbr.rel (%p461) target = $region68
        $region67: #{tpu_custom_call.1} parent=55 // pred_region
          %s464 = sand.u32 %s28, 1
          %s465 = scalar_lea.sflag [#allocation7], %s464
          %s466 = sand.u32 %s187, 1
          %s467 = smul.addr %s466, 2
          %s468 = scalar_lea.vmem [#allocation8], %s467
          %469 = dma.done %s465, 32
        $region68: #{tpu_custom_call.1} parent=55 // pred_fallthru
          _
      $region56: #{tpu_custom_call.1} parent=5 // pred_fallthru
        _
    $region6: #{tpu_custom_call.1} parent=1 // loop_footer
      %s26 = sadd.s32 1, %s22
    $region7: #{tpu_custom_call.1} parent=1 // loop_footer_branch
      %21 = sbr.rel target = $region3
    $region8: #{tpu_custom_call.1} parent=1 // loop_exit
      _
    %470 = vsyncpa [#allocation3], 1
    %s471 = scalar_lea.sflag [#allocation3], 1
    %472 = vsyncpa %s471, 1
    %473 = vsyncpa [#allocation4], 1
    %s474 = scalar_lea.sflag [#allocation4], 1
    %475 = vsyncpa %s474, 1
    %476 = vsyncpa [#allocation7], 1
    %s477 = scalar_lea.sflag [#allocation7], 1
    %478 = vsyncpa %s477, 1

</llo_original>
